<compile_context>
chip_gen: v6e
topology: v6e:2x2x1
jax: 0.10.0
libtpu: 0.0.40
codegen_flags: <defaults>
</compile_context>

<pallas_src>
import functools

import jax
import jax.numpy as jnp
from jax.experimental import pallas as pl
from jax.experimental.pallas import tpu as pltpu


_LN_EPS = 1e-5
_INV_SQRT2 = 0.7071067811865476


def _round_up(x, m):
    return (x + m - 1) // m * m


def _cdiv(a, b):
    return (a + b - 1) // b


def _ln_w1_gelu(x_ref, gb_ref, w1_ref, *, d_true, mask_lanes):
    """LayerNorm (f32 stats) -> Linear(D->H) on the MXU -> exact erf-GELU."""
    x = x_ref[...].astype(jnp.float32)
    inv_d = 1.0 / d_true
    # Padded feature lanes of x are zero, so summing over the padded width
    # equals summing over the true width.
    mean = jnp.sum(x, axis=-1, keepdims=True) * inv_d
    xc = x - mean
    if mask_lanes:
        lane = jax.lax.broadcasted_iota(jnp.int32, x.shape, dimension=1)
        xc = jnp.where(lane < int(d_true), xc, 0.0)
    var = jnp.sum(xc * xc, axis=-1, keepdims=True) * inv_d
    inv = jax.lax.rsqrt(var + _LN_EPS)
    gamma = gb_ref[0:1, :].astype(jnp.float32)
    beta = gb_ref[1:2, :].astype(jnp.float32)
    xn = xc * inv * gamma + beta
    # MXU consumes the weights' native dtype (bf16 weights -> bf16 feeds),
    # f32 accumulation.
    h = jnp.dot(xn.astype(w1_ref.dtype), w1_ref[...],
                preferred_element_type=jnp.float32)
    # Exact erf-GELU (torch nn.GELU default).
    return 0.5 * h * (1.0 + jax.lax.erf(h * _INV_SQRT2))


def _kernel_resident(x_ref, gb_ref, w1_ref, w2_ref, o_ref, *, d_true, mask_lanes):
    # 1-D grid over token tiles; the whole W2 stays resident in VMEM so the
    # fused LN -> W1 -> GELU -> W2 runs as one streaming pass over tokens.
    h = _ln_w1_gelu(x_ref, gb_ref, w1_ref, d_true=d_true, mask_lanes=mask_lanes)
    out = jnp.dot(h.astype(w2_ref.dtype), w2_ref[...],
                  preferred_element_type=jnp.float32)
    o_ref[...] = out.astype(o_ref.dtype)


def _kernel_tiled(x_ref, gb_ref, w1_ref, w2_ref, o_ref, h_ref, *, d_true, mask_lanes):
    # 2-D grid (token tile i, W2 output tile j).  GELU(LN(x) @ W1) for the
    # current token tile is computed once (j == 0) into VMEM scratch and
    # reused for every output tile, bounding W2 residency to Hp * tn.
    j = pl.program_id(1)

    @pl.when(j == 0)
    def _():
        h = _ln_w1_gelu(x_ref, gb_ref, w1_ref, d_true=d_true,
                        mask_lanes=mask_lanes)
        h_ref[...] = h.astype(h_ref.dtype)

    # TODO(synk): double-buffer h_ref ((2, tm, Hp)) and compute tile i+1's
    # intermediate during tile i's later j steps so LN+matmul1+erf overlaps
    # the W2 matmuls instead of serializing at j == 0.
    out = jnp.dot(h_ref[...], w2_ref[...], preferred_element_type=jnp.float32)
    o_ref[...] = out.astype(o_ref.dtype)


def _vmem_budget_bytes():
    # Per-TensorCore VMEM with ~20% headroom for compiler temps / prefetch
    # buffers (v5e/v6e: 128 MiB -> ~102 MiB; v7x: 64 MiB -> ~51 MiB).
    try:
        cap = pltpu.get_tpu_info().vmem_capacity_bytes
    except Exception:
        cap = 64 * 1024 * 1024  # most conservative (v7x per-TC) default
    return int(cap * 0.8)


def _select_tiles(T, Dp, Hp, x_bytes, w_bytes, o_bytes, budget):
    """Pick (tm, tn, tiled) under the per-core VMEM budget.

    Prefers full-W2 residency (tn == Hp: no inner grid axis, W2 loaded once),
    falling back to tiling W2 over its output dim with a cached intermediate.
    """
    const_res = Dp * Hp * w_bytes + 2 * Dp * 4     # W1 + gamma/beta, 1-buffered
    tm_cap = max(16, min(1024, _round_up(T, 16)))

    # Variant A: whole W2 resident (single grid axis over tokens).
    for tm in (1024, 512, 256, 128, 64, 32, 16):
        if tm > tm_cap:
            continue
        foot = (const_res + Hp * Hp * w_bytes      # W2, single-buffered
                + 2 * tm * Dp * x_bytes            # x tile, double-buffered
                + 2 * tm * Hp * o_bytes            # out tile, double-buffered
                + tm * Hp * 4)                     # f32 intermediate temps
        if foot <= budget:
            return tm, Hp, False

    # Variant B: tile W2 over the output dim; intermediate cached in scratch.
    tn_cands = sorted(
        (t for t in range(128, min(Hp, 2048) + 1, 128) if Hp % t == 0),
        reverse=True)
    for tm in (512, 256, 128, 64, 32, 16):
        if tm > tm_cap:
            continue
        for tn in tn_cands:
            foot = (const_res
                    + 2 * Hp * tn * w_bytes        # W2 tile, double-buffered
                    + 2 * tm * Dp * x_bytes
                    + 2 * tm * tn * o_bytes
                    + tm * Hp * w_bytes            # h scratch
                    + tm * Hp * 4)                 # f32 temps at j == 0
            if foot <= budget:
                return tm, tn, True
    return 16, 128, True


def resampler_projector(x, gamma, beta, w1, w2, *, tm=None, tn=None):
    """ResamplerProjector forward.

    x            : (B, ..., D)  reshaped to (B, -1, D) like the torch module
    gamma, beta  : (D,)         LayerNorm affine params
    w1           : (D, H)       Linear1 weight, already transposed to (in, out)
    w2           : (H, H)       Linear2 weight, already transposed to (in, out)
    returns (B, S, H) with S = prod(middle dims of x).
    """
    B = x.shape[0]
    D = x.shape[-1]
    H = w1.shape[1]

    x2d = x.reshape(-1, D)                 # (T, D) flattened batch*seq tokens
    T = x2d.shape[0]
    S = T // B

    Dp = _round_up(D, 128)
    Hp = _round_up(H, 128)

    x_bytes = jnp.dtype(x.dtype).itemsize
    w_bytes = jnp.dtype(w1.dtype).itemsize
    o_bytes = x_bytes

    budget = _vmem_budget_bytes()
    sel_tm, sel_tn, _ = _select_tiles(T, Dp, Hp, x_bytes, w_bytes, o_bytes,
                                      budget)
    if tm is None:
        tm = sel_tm
    if tn is None:
        tn = sel_tn

    tm = max(16, _round_up(min(tm, _round_up(T, 16)), 16))
    # Megacore: if the call would be a single token tile but has enough rows,
    # split it so the ("parallel") token axis shards across both v7x cores.
    if _cdiv(T, tm) == 1 and T > 256:
        tm = _round_up(_cdiv(T, 2), 16)

    tiled = tn < Hp
    nt = _cdiv(T, tm)
    nj = _cdiv(Hp, tn) if tiled else 1

    # Pad only the feature dims when misaligned; the token tail is handled
    # in-kernel by Pallas ragged-edge masking (no wrapper-side copy of x).
    xp = x2d if D == Dp else jnp.pad(x2d, ((0, 0), (0, Dp - D)))
    gb = jnp.stack([gamma, beta], axis=0)
    if D != Dp:
        gb = jnp.pad(gb, ((0, 0), (0, Dp - D)))
    w1p = w1 if (D, H) == (Dp, Hp) else jnp.pad(w1, ((0, Dp - D), (0, Hp - H)))
    w2p = w2 if H == Hp else jnp.pad(w2, ((0, Hp - H), (0, Hp - H)))

    mask_lanes = (D != Dp)

    def call(single_buffer):
        one_buf = pl.Buffered(1) if single_buffer else None
        if tiled:
            kernel = functools.partial(_kernel_tiled, d_true=float(D),
                                       mask_lanes=mask_lanes)
            grid = (nt, nj)
            in_specs = [
                pl.BlockSpec((tm, Dp), lambda i, j: (i, 0)),
                pl.BlockSpec((2, Dp), lambda i, j: (0, 0),
                             pipeline_mode=one_buf),
                pl.BlockSpec((Dp, Hp), lambda i, j: (0, 0),
                             pipeline_mode=one_buf),
                pl.BlockSpec((Hp, tn), lambda i, j: (0, j)),
            ]
            out_specs = pl.BlockSpec((tm, tn), lambda i, j: (i, j))
            scratch = [pltpu.VMEM((tm, Hp), w2.dtype)]
            semantics = ("parallel", "arbitrary")
        else:
            kernel = functools.partial(_kernel_resident, d_true=float(D),
                                       mask_lanes=mask_lanes)
            grid = (nt,)
            in_specs = [
                pl.BlockSpec((tm, Dp), lambda i: (i, 0)),
                pl.BlockSpec((2, Dp), lambda i: (0, 0), pipeline_mode=one_buf),
                pl.BlockSpec((Dp, Hp), lambda i: (0, 0), pipeline_mode=one_buf),
                pl.BlockSpec((Hp, Hp), lambda i: (0, 0), pipeline_mode=one_buf),
            ]
            out_specs = pl.BlockSpec((tm, Hp), lambda i: (i, 0))
            scratch = []
            semantics = ("parallel",)

        return pl.pallas_call(
            kernel,
            out_shape=jax.ShapeDtypeStruct((T, Hp), x.dtype),
            grid_spec=pltpu.PrefetchScalarGridSpec(
                num_scalar_prefetch=0,
                grid=grid,
                in_specs=in_specs,
                out_specs=out_specs,
                scratch_shapes=scratch,
            ),
            compiler_params=pltpu.CompilerParams(
                dimension_semantics=semantics,
                vmem_limit_bytes=budget,
            ),
        )(xp, gb, w1p, w2p)

    try:
        out2d = call(single_buffer=True)
    except Exception:
        # Fallback for jax builds that reject pipeline_mode=pl.Buffered(1):
        # default double-buffering (identical numerics, more VMEM).
        out2d = call(single_buffer=False)

    if H != Hp:
        out2d = out2d[:, :H]
    return out2d.reshape(B, S, H)


def _reference(x, gamma, beta, w1, w2):
    B, D = x.shape[0], x.shape[-1]
    x = x.reshape(B, -1, D).astype(jnp.float32)
    g = gamma.astype(jnp.float32)
    b = beta.astype(jnp.float32)
    mean = jnp.mean(x, axis=-1, keepdims=True)
    var = jnp.mean((x - mean) ** 2, axis=-1, keepdims=True)
    xn = (x - mean) * jax.lax.rsqrt(var + _LN_EPS) * g + b
    h = xn @ w1.astype(jnp.float32)
    h = 0.5 * h * (1.0 + jax.lax.erf(h * _INV_SQRT2))
    return h @ w2.astype(jnp.float32)


if __name__ == "__main__":
    # Small deterministic shapes consistent with the module:
    # proj_input_size D = 32, hidden_size H = 32, batch B = 2, seq S = 8.
    B, S, D, H = 2, 8, 32, 32
    key = jax.random.PRNGKey(0)
    kx, kw1, kw2, kw3, kw4 = jax.random.split(key, 5)

    x = jax.random.normal(kx, (B, S, D), dtype=jnp.float32)

    # init_weights(): Linear.weight ~ N(0, 0.02), no bias; LN weight=1, bias=0.
    # torch Linear weight is (out, in); we store the transpose (in, out).
    w1 = (0.02 * jax.random.normal(kw1, (H, D), dtype=jnp.float32)).T  # (D, H)
    w2 = (0.02 * jax.random.normal(kw2, (H, H), dtype=jnp.float32)).T  # (H, H)
    gamma = jnp.ones((D,), dtype=jnp.float32)
    beta = jnp.zeros((D,), dtype=jnp.float32)

    # --- f32 path (W2-resident kernel): exact match against reference -------
    out = jax.block_until_ready(resampler_projector(x, gamma, beta, w1, w2))
    ref = _reference(x, gamma, beta, w1, w2)
    assert out.shape == (B, S, H), out.shape
    assert jnp.allclose(out, ref.astype(out.dtype), atol=1e-4, rtol=1e-4), (
        float(jnp.max(jnp.abs(out - ref))))

    # --- bf16 path: MXU-native weight dtype with f32 accumulation -----------
    out_bf16 = jax.block_until_ready(
        resampler_projector(
            x.astype(jnp.bfloat16),
            gamma.astype(jnp.bfloat16), beta.astype(jnp.bfloat16),
            w1.astype(jnp.bfloat16), w2.astype(jnp.bfloat16)))
    assert out_bf16.shape == (B, S, H), out_bf16.shape
    assert jnp.allclose(out_bf16.astype(jnp.float32), ref,
                        atol=2e-2, rtol=2e-2), (
        float(jnp.max(jnp.abs(out_bf16.astype(jnp.float32) - ref))))

    # --- tiled-W2 path (forced tn < Hp) to exercise the scratch kernel ------
    H2 = 256
    w1b = (0.02 * jax.random.normal(kw3, (H2, D), dtype=jnp.float32)).T
    w2b = (0.02 * jax.random.normal(kw4, (H2, H2), dtype=jnp.float32)).T
    out_t = jax.block_until_ready(
        resampler_projector(x, gamma, beta, w1b, w2b, tn=128))
    ref_t = _reference(x, gamma, beta, w1b, w2b)
    assert out_t.shape == (B, S, H2), out_t.shape
    assert jnp.allclose(out_t, ref_t.astype(out_t.dtype),
                        atol=1e-4, rtol=1e-4), (
        float(jnp.max(jnp.abs(out_t - ref_t))))

    print("KERNEL_OK")
</pallas_src>

<mosaic_0001>
module attributes {stable_mosaic.version = 11 : i64} {
  func.func @_kernel_resident(%arg0: i32, %arg1: memref<16x128xf32, #tpu.memory_space<vmem>>, %arg2: memref<2x128xf32, #tpu.memory_space<vmem>>, %arg3: memref<128x128xf32, #tpu.memory_space<vmem>>, %arg4: memref<128x128xf32, #tpu.memory_space<vmem>>, %arg5: memref<16x128xf32, #tpu.memory_space<vmem>>) attributes {dimension_semantics = [#tpu.dimension_semantics<parallel>], iteration_bounds = array<i64: 1>, scalar_prefetch = 0 : i64, scratch_operands = 0 : i64, tpu.core_type = #tpu.core_type<tc>, window_params = [{transform_indices = @transform_0, window_bounds = array<i64: 16, 128>}, {pipeline_mode = #tpu.pipeline_mode<synchronous>, transform_indices = @transform_1, window_bounds = array<i64: 2, 128>}, {pipeline_mode = #tpu.pipeline_mode<synchronous>, transform_indices = @transform_2, window_bounds = array<i64: 128, 128>}, {pipeline_mode = #tpu.pipeline_mode<synchronous>, transform_indices = @transform_3, window_bounds = array<i64: 128, 128>}, {transform_indices = @transform_4, window_bounds = array<i64: 16, 128>}]} {
    %c0 = arith.constant 0 : index
    %c0_0 = arith.constant 0 : index
    %0 = vector.load %arg1[%c0, %c0_0] : memref<16x128xf32, #tpu.memory_space<vmem>>, vector<16x128xf32>
    %cst = arith.constant dense<0.000000e+00> : vector<16xf32>
    %1 = vector.multi_reduction <add>, %0, %cst [1] : vector<16x128xf32> to vector<16xf32>
    %2 = vector.shape_cast %1 : vector<16xf32> to vector<16x1xf32>
    %cst_1 = arith.constant 3.125000e-02 : f32
    %3 = vector.broadcast %cst_1 : f32 to vector<16x1xf32>
    %4 = arith.mulf %2, %3 : vector<16x1xf32>
    %5 = vector.broadcast %4 : vector<16x1xf32> to vector<16x128xf32>
    %6 = arith.subf %0, %5 : vector<16x128xf32>
    %7 = tpu.iota {dimensions = array<i32: 1>} : vector<16x128xi32>
    %c32_i32 = arith.constant 32 : i32
    %8 = vector.broadcast %c32_i32 : i32 to vector<16x128xi32>
    %9 = arith.cmpi slt, %7, %8 : vector<16x128xi32>
    %cst_2 = arith.constant 0.000000e+00 : f32
    %10 = vector.broadcast %cst_2 : f32 to vector<16x128xf32>
    %11 = arith.select %9, %6, %10 : vector<16x128xi1>, vector<16x128xf32>
    %12 = arith.mulf %11, %11 : vector<16x128xf32>
    %cst_3 = arith.constant dense<0.000000e+00> : vector<16xf32>
    %13 = vector.multi_reduction <add>, %12, %cst_3 [1] : vector<16x128xf32> to vector<16xf32>
    %14 = vector.shape_cast %13 : vector<16xf32> to vector<16x1xf32>
    %cst_4 = arith.constant 3.125000e-02 : f32
    %15 = vector.broadcast %cst_4 : f32 to vector<16x1xf32>
    %16 = arith.mulf %14, %15 : vector<16x1xf32>
    %cst_5 = arith.constant 9.99999974E-6 : f32
    %17 = vector.broadcast %cst_5 : f32 to vector<16x1xf32>
    %18 = arith.addf %16, %17 : vector<16x1xf32>
    %19 = math.rsqrt %18 : vector<16x1xf32>
    %c0_6 = arith.constant 0 : index
    %c0_7 = arith.constant 0 : index
    %20 = vector.load %arg2[%c0_6, %c0_7] : memref<2x128xf32, #tpu.memory_space<vmem>>, vector<1x128xf32>
    %c1 = arith.constant 1 : index
    %c0_8 = arith.constant 0 : index
    %21 = vector.load %arg2[%c1, %c0_8] : memref<2x128xf32, #tpu.memory_space<vmem>>, vector<1x128xf32>
    %22 = vector.broadcast %19 : vector<16x1xf32> to vector<16x128xf32>
    %23 = arith.mulf %11, %22 : vector<16x128xf32>
    %24 = vector.broadcast %20 : vector<1x128xf32> to vector<16x128xf32>
    %25 = arith.mulf %23, %24 : vector<16x128xf32>
    %26 = vector.broadcast %21 : vector<1x128xf32> to vector<16x128xf32>
    %27 = arith.addf %25, %26 : vector<16x128xf32>
    %c0_9 = arith.constant 0 : index
    %c0_10 = arith.constant 0 : index
    %28 = vector.load %arg3[%c0_9, %c0_10] : memref<128x128xf32, #tpu.memory_space<vmem>>, vector<128x128xf32>
    %cst_11 = arith.constant dense<0.000000e+00> : vector<16x128xf32>
    %29 = tpu.matmul %27, %28, %cst_11 {dimension_numbers = #tpu.dot_dimension_numbers<[1], [0], [0], [1], [0, 0, 1, 1], [], []>} : vector<16x128xf32>, vector<128x128xf32>, vector<16x128xf32> -> vector<16x128xf32>
    %cst_12 = arith.constant 5.000000e-01 : f32
    %30 = vector.broadcast %cst_12 : f32 to vector<16x128xf32>
    %31 = arith.mulf %30, %29 : vector<16x128xf32>
    %cst_13 = arith.constant 0.707106769 : f32
    %32 = vector.broadcast %cst_13 : f32 to vector<16x128xf32>
    %33 = arith.mulf %29, %32 : vector<16x128xf32>
    %34 = math.erf %33 : vector<16x128xf32>
    %cst_14 = arith.constant 1.000000e+00 : f32
    %35 = vector.broadcast %cst_14 : f32 to vector<16x128xf32>
    %36 = arith.addf %35, %34 : vector<16x128xf32>
    %37 = arith.mulf %31, %36 : vector<16x128xf32>
    %c0_15 = arith.constant 0 : index
    %c0_16 = arith.constant 0 : index
    %38 = vector.load %arg4[%c0_15, %c0_16] : memref<128x128xf32, #tpu.memory_space<vmem>>, vector<128x128xf32>
    %cst_17 = arith.constant dense<0.000000e+00> : vector<16x128xf32>
    %39 = tpu.matmul %37, %38, %cst_17 {dimension_numbers = #tpu.dot_dimension_numbers<[1], [0], [0], [1], [0, 0, 1, 1], [], []>} : vector<16x128xf32>, vector<128x128xf32>, vector<16x128xf32> -> vector<16x128xf32>
    %c0_18 = arith.constant 0 : index
    %c0_19 = arith.constant 0 : index
    %40 = vector.load %arg5[%c0_18, %c0_19] : memref<16x128xf32, #tpu.memory_space<vmem>>, vector<16x128xf32>
    tpu.vector_store %arg5[%c0_18, %c0_19], %39 {strides = array<i32>} : memref<16x128xf32, #tpu.memory_space<vmem>>, vector<16x128xf32>,
    return
  }
  func.func @transform_0(%arg0: i32) -> (i32, i32) {
    %c0_i32 = arith.constant 0 : i32
    %c0_i32_0 = arith.constant 0 : i32
    return %arg0, %c0_i32 : i32, i32
  }
  func.func @transform_1(%arg0: i32) -> (i32, i32) {
    %c0_i32 = arith.constant 0 : i32
    %c0_i32_0 = arith.constant 0 : i32
    %c0_i32_1 = arith.constant 0 : i32
    return %c0_i32, %c0_i32_0 : i32, i32
  }
  func.func @transform_2(%arg0: i32) -> (i32, i32) {
    %c0_i32 = arith.constant 0 : i32
    %c0_i32_0 = arith.constant 0 : i32
    %c0_i32_1 = arith.constant 0 : i32
    return %c0_i32, %c0_i32_0 : i32, i32
  }
  func.func @transform_3(%arg0: i32) -> (i32, i32) {
    %c0_i32 = arith.constant 0 : i32
    %c0_i32_0 = arith.constant 0 : i32
    %c0_i32_1 = arith.constant 0 : i32
    return %c0_i32, %c0_i32_0 : i32, i32
  }
  func.func @transform_4(%arg0: i32) -> (i32, i32) {
    %c0_i32 = arith.constant 0 : i32
    %c0_i32_0 = arith.constant 0 : i32
    return %arg0, %c0_i32 : i32, i32
  }
}

module attributes {stable_mosaic.version = 11 : i64} {
  func.func @_kernel_resident(%arg0: i32, %arg1: memref<16x128xf32, #tpu.memory_space<vmem>>, %arg2: memref<2x128xf32, #tpu.memory_space<vmem>>, %arg3: memref<128x128xf32, #tpu.memory_space<vmem>>, %arg4: memref<128x128xf32, #tpu.memory_space<vmem>>, %arg5: memref<16x128xf32, #tpu.memory_space<vmem>>) attributes {dimension_semantics = [#tpu.dimension_semantics<parallel>], iteration_bounds = array<i64: 1>, scalar_prefetch = 0 : i64, scratch_operands = 0 : i64, tpu.core_type = #tpu.core_type<tc>, window_params = [{transform_indices = @transform_0, window_bounds = array<i64: 16, 128>}, {pipeline_mode = #tpu.pipeline_mode<synchronous>, transform_indices = @transform_1, window_bounds = array<i64: 2, 128>}, {pipeline_mode = #tpu.pipeline_mode<synchronous>, transform_indices = @transform_2, window_bounds = array<i64: 128, 128>}, {pipeline_mode = #tpu.pipeline_mode<synchronous>, transform_indices = @transform_3, window_bounds = array<i64: 128, 128>}, {transform_indices = @transform_4, window_bounds = array<i64: 16, 128>}]} {
    %c0 = arith.constant 0 : index
    %c0_0 = arith.constant 0 : index
    %0 = vector.load %arg1[%c0, %c0_0] : memref<16x128xf32, #tpu.memory_space<vmem>>, vector<16x128xf32>
    %cst = arith.constant dense<0.000000e+00> : vector<16xf32>
    %1 = vector.multi_reduction <add>, %0, %cst [1] : vector<16x128xf32> to vector<16xf32>
    %2 = vector.shape_cast %1 : vector<16xf32> to vector<16x1xf32>
    %cst_1 = arith.constant 3.125000e-02 : f32
    %3 = vector.broadcast %cst_1 : f32 to vector<16x1xf32>
    %4 = arith.mulf %2, %3 : vector<16x1xf32>
    %5 = vector.broadcast %4 : vector<16x1xf32> to vector<16x128xf32>
    %6 = arith.subf %0, %5 : vector<16x128xf32>
    %7 = tpu.iota {dimensions = array<i32: 1>} : vector<16x128xi32>
    %c32_i32 = arith.constant 32 : i32
    %8 = vector.broadcast %c32_i32 : i32 to vector<16x128xi32>
    %9 = arith.cmpi slt, %7, %8 : vector<16x128xi32>
    %cst_2 = arith.constant 0.000000e+00 : f32
    %10 = vector.broadcast %cst_2 : f32 to vector<16x128xf32>
    %11 = arith.select %9, %6, %10 : vector<16x128xi1>, vector<16x128xf32>
    %12 = arith.mulf %11, %11 : vector<16x128xf32>
    %cst_3 = arith.constant dense<0.000000e+00> : vector<16xf32>
    %13 = vector.multi_reduction <add>, %12, %cst_3 [1] : vector<16x128xf32> to vector<16xf32>
    %14 = vector.shape_cast %13 : vector<16xf32> to vector<16x1xf32>
    %cst_4 = arith.constant 3.125000e-02 : f32
    %15 = vector.broadcast %cst_4 : f32 to vector<16x1xf32>
    %16 = arith.mulf %14, %15 : vector<16x1xf32>
    %cst_5 = arith.constant 9.99999974E-6 : f32
    %17 = vector.broadcast %cst_5 : f32 to vector<16x1xf32>
    %18 = arith.addf %16, %17 : vector<16x1xf32>
    %19 = math.rsqrt %18 : vector<16x1xf32>
    %c0_6 = arith.constant 0 : index
    %c0_7 = arith.constant 0 : index
    %20 = vector.load %arg2[%c0_6, %c0_7] : memref<2x128xf32, #tpu.memory_space<vmem>>, vector<1x128xf32>
    %c1 = arith.constant 1 : index
    %c0_8 = arith.constant 0 : index
    %21 = vector.load %arg2[%c1, %c0_8] : memref<2x128xf32, #tpu.memory_space<vmem>>, vector<1x128xf32>
    %22 = vector.broadcast %19 : vector<16x1xf32> to vector<16x128xf32>
    %23 = arith.mulf %11, %22 : vector<16x128xf32>
    %24 = vector.broadcast %20 : vector<1x128xf32> to vector<16x128xf32>
    %25 = arith.mulf %23, %24 : vector<16x128xf32>
    %26 = vector.broadcast %21 : vector<1x128xf32> to vector<16x128xf32>
    %27 = arith.addf %25, %26 : vector<16x128xf32>
    %c0_9 = arith.constant 0 : index
    %c0_10 = arith.constant 0 : index
    %28 = vector.load %arg3[%c0_9, %c0_10] : memref<128x128xf32, #tpu.memory_space<vmem>>, vector<128x128xf32>
    %cst_11 = arith.constant dense<0.000000e+00> : vector<16x128xf32>
    %29 = tpu.matmul %27, %28, %cst_11 {dimension_numbers = #tpu.dot_dimension_numbers<[1], [0], [0], [1], [0, 0, 1, 1], [], []>} : vector<16x128xf32>, vector<128x128xf32>, vector<16x128xf32> -> vector<16x128xf32>
    %cst_12 = arith.constant 5.000000e-01 : f32
    %30 = vector.broadcast %cst_12 : f32 to vector<16x128xf32>
    %31 = arith.mulf %30, %29 : vector<16x128xf32>
    %cst_13 = arith.constant 0.707106769 : f32
    %32 = vector.broadcast %cst_13 : f32 to vector<16x128xf32>
    %33 = arith.mulf %29, %32 : vector<16x128xf32>
    %34 = math.erf %33 : vector<16x128xf32>
    %cst_14 = arith.constant 1.000000e+00 : f32
    %35 = vector.broadcast %cst_14 : f32 to vector<16x128xf32>
    %36 = arith.addf %35, %34 : vector<16x128xf32>
    %37 = arith.mulf %31, %36 : vector<16x128xf32>
    %c0_15 = arith.constant 0 : index
    %c0_16 = arith.constant 0 : index
    %38 = vector.load %arg4[%c0_15, %c0_16] : memref<128x128xf32, #tpu.memory_space<vmem>>, vector<128x128xf32>
    %cst_17 = arith.constant dense<0.000000e+00> : vector<16x128xf32>
    %39 = tpu.matmul %37, %38, %cst_17 {dimension_numbers = #tpu.dot_dimension_numbers<[1], [0], [0], [1], [0, 0, 1, 1], [], []>} : vector<16x128xf32>, vector<128x128xf32>, vector<16x128xf32> -> vector<16x128xf32>
    %c0_18 = arith.constant 0 : index
    %c0_19 = arith.constant 0 : index
    %40 = vector.load %arg5[%c0_18, %c0_19] : memref<16x128xf32, #tpu.memory_space<vmem>>, vector<16x128xf32>
    tpu.vector_store %arg5[%c0_18, %c0_19], %39 {strides = array<i32>} : memref<16x128xf32, #tpu.memory_space<vmem>>, vector<16x128xf32>,
    return
  }
  func.func @transform_0(%arg0: i32) -> (i32, i32) {
    %c0_i32 = arith.constant 0 : i32
    %c0_i32_0 = arith.constant 0 : i32
    return %arg0, %c0_i32 : i32, i32
  }
  func.func @transform_1(%arg0: i32) -> (i32, i32) {
    %c0_i32 = arith.constant 0 : i32
    %c0_i32_0 = arith.constant 0 : i32
    %c0_i32_1 = arith.constant 0 : i32
    return %c0_i32, %c0_i32_0 : i32, i32
  }
  func.func @transform_2(%arg0: i32) -> (i32, i32) {
    %c0_i32 = arith.constant 0 : i32
    %c0_i32_0 = arith.constant 0 : i32
    %c0_i32_1 = arith.constant 0 : i32
    return %c0_i32, %c0_i32_0 : i32, i32
  }
  func.func @transform_3(%arg0: i32) -> (i32, i32) {
    %c0_i32 = arith.constant 0 : i32
    %c0_i32_0 = arith.constant 0 : i32
    %c0_i32_1 = arith.constant 0 : i32
    return %c0_i32, %c0_i32_0 : i32, i32
  }
  func.func @transform_4(%arg0: i32) -> (i32, i32) {
    %c0_i32 = arith.constant 0 : i32
    %c0_i32_0 = arith.constant 0 : i32
    return %arg0, %c0_i32 : i32, i32
  }
}

</mosaic_0001>

<llo_original>
// kernel: tpu_custom_call.1
$region0: #{tpu_custom_call.1}
  #allocation0 [shape = 'u32[]', space=smem, size = 0x4, offset = 0x4, fixed_abs, tag = 'smem constant byte address 0x4 - core index']
  #allocation1 [shape = 'u32[144,128]{1,0:T(1,128)}', space=vmem, size = 0x12000, scoped, tag = 'internal scratch']
  %s0 = inlined_call_operand.hbm [shape: f32[16,128], index: 0, kind: input, shape index: {}]
  %s1 = inlined_call_operand.hbm [shape: f32[2,128], index: 1, kind: input, shape index: {}]
  %s2 = inlined_call_operand.hbm [shape: f32[128,128], index: 2, kind: input, shape index: {}]
  %s3 = inlined_call_operand.hbm [shape: f32[128,128], index: 3, kind: input, shape index: {}]
  %s4 = inlined_call_operand.hbm [shape: f32[16,128], index: 4, kind: output, shape index: {}]
  %s5 = sld [smem:[#allocation0]]
  $region42: #{tpu_custom_call.1} parent=0
    _
  %s7 = ssub.s32 1, %s5
  %s8 = scalar_select 0, %s7, %s5
  $region1: #{tpu_custom_call.1} parent=0
    #allocation2 [shape = 'u8[8192]{0}', space=vmem, size = 0x2000, scoped, tag = 'input window, operand 0, single buffered']
    #allocation3 [shape = 's32[1]{0}', space=sflag, size = 0x4, scoped, tag = 'scoped memory for tpu_custom_call.1']
    #allocation4 [shape = 's32[1]{0}', space=sflag, size = 0x4, scoped, tag = 'scoped memory for tpu_custom_call.1']
    #allocation5 [shape = 'u8[1024]{0}', space=vmem, size = 0x400, scoped, tag = 'input window, operand 1, single buffered']
    #allocation6 [shape = 's32[1]{0}', space=sflag, size = 0x4, scoped, tag = 'scoped memory for tpu_custom_call.1']
    #allocation7 [shape = 'u8[65536]{0}', space=vmem, size = 0x10000, scoped, tag = 'input window, operand 2, single buffered']
    #allocation8 [shape = 'u8[65536]{0}', space=vmem, size = 0x10000, scoped, tag = 'input window, operand 3, single buffered']
    #allocation9 [shape = 's32[1]{0}', space=sflag, size = 0x4, scoped, tag = 'scoped memory for tpu_custom_call.1']
    #allocation10 [shape = 'u8[8192]{0}', space=vmem, size = 0x2000, scoped, tag = 'output window, operand 0, single buffered']
    %9 = vsyncpa [#allocation3], 0
    %10 = vsyncpa [#allocation6], 0
    %11 = vsyncpa [#allocation9], 0
    %12 = vsyncpa [#allocation4], 0
    // Predicated region
    $region2: #{tpu_custom_call.1} parent=1 // pred_check
      _
    $region3: #{tpu_custom_call.1} parent=1 // pred_check_branch
      %14 = sbr.rel (0) target = $region5
    $region4: #{tpu_custom_call.1} parent=1 // pred_region
      %s16 = ssub.s32 256, 256
      %17 = vsyncadd [#allocation3], %s16
      %s18 = sshll.u32 [#allocation2], 4
      %s19 = int_to_ptr.vmem [resolvable:$true] %s18
      %24 = dma.hbm_to_vmem [thread:$0]  %s0, 256, %s19, [#allocation3], 128, 128, 8
    $region5: #{tpu_custom_call.1} parent=1 // pred_fallthru
      _
    // Predicated region
    $region6: #{tpu_custom_call.1} parent=1 // pred_check
      _
    $region7: #{tpu_custom_call.1} parent=1 // pred_check_branch
      %26 = sbr.rel (0) target = $region9
    $region8: #{tpu_custom_call.1} parent=1 // pred_region
      %s28 = ssub.s32 32, 32
      %29 = vsyncadd [#allocation6], %s28
      %s31 = sshll.u32 [#allocation5], 4
      %s32 = int_to_ptr.vmem [resolvable:$true] %s31
      %34 = dma.hbm_to_vmem [thread:$0]  %s1, 32, %s32, [#allocation6]
    $region9: #{tpu_custom_call.1} parent=1 // pred_fallthru
      _
    // Predicated region
    $region10: #{tpu_custom_call.1} parent=1 // pred_check
      _
    $region11: #{tpu_custom_call.1} parent=1 // pred_check_branch
      %36 = sbr.rel (0) target = $region13
    $region12: #{tpu_custom_call.1} parent=1 // pred_region
      %s38 = ssub.s32 2048, 2048
      %39 = vsyncadd [#allocation6], %s38
      %s40 = sshll.u32 [#allocation7], 4
      %s41 = int_to_ptr.vmem [resolvable:$true] %s40
      %46 = dma.hbm_to_vmem [thread:$0]  %s2, 2048, %s41, [#allocation6], 128, 128, 8
    $region13: #{tpu_custom_call.1} parent=1 // pred_fallthru
      _
    // Predicated region
    $region14: #{tpu_custom_call.1} parent=1 // pred_check
      _
    $region15: #{tpu_custom_call.1} parent=1 // pred_check_branch
      %48 = sbr.rel (0) target = $region17
    $region16: #{tpu_custom_call.1} parent=1 // pred_region
      %s50 = ssub.s32 2048, 2048
      %51 = vsyncadd [#allocation9], %s50
      %s52 = sshll.u32 [#allocation8], 4
      %s53 = int_to_ptr.vmem [resolvable:$true] %s52
      %58 = dma.hbm_to_vmem [thread:$0]  %s3, 2048, %s53, [#allocation9], 128, 128, 8
    $region17: #{tpu_custom_call.1} parent=1 // pred_fallthru
      _
    // Predicated region
    $region18: #{tpu_custom_call.1} parent=1 // pred_check
      _
    $region19: #{tpu_custom_call.1} parent=1 // pred_check_branch
      %60 = sbr.rel (0) target = $region21
    $region20: #{tpu_custom_call.1} parent=1 // pred_region
      %61 = dma.done [#allocation3], 256
    $region21: #{tpu_custom_call.1} parent=1 // pred_fallthru
      _
    // Predicated region
    $region22: #{tpu_custom_call.1} parent=1 // pred_check
      _
    $region23: #{tpu_custom_call.1} parent=1 // pred_check_branch
      %63 = sbr.rel (0) target = $region25
    $region24: #{tpu_custom_call.1} parent=1 // pred_region
      %64 = dma.done [#allocation6], 32
    $region25: #{tpu_custom_call.1} parent=1 // pred_fallthru
      _
    // Predicated region
    $region26: #{tpu_custom_call.1} parent=1 // pred_check
      _
    $region27: #{tpu_custom_call.1} parent=1 // pred_check_branch
      %66 = sbr.rel (0) target = $region29
    $region28: #{tpu_custom_call.1} parent=1 // pred_region
      %67 = dma.done [#allocation6], 2048
    $region29: #{tpu_custom_call.1} parent=1 // pred_fallthru
      _
    // Predicated region
    $region30: #{tpu_custom_call.1} parent=1 // pred_check
      _
    $region31: #{tpu_custom_call.1} parent=1 // pred_check_branch
      %69 = sbr.rel (0) target = $region33
    $region32: #{tpu_custom_call.1} parent=1 // pred_region
      %70 = dma.done [#allocation9], 2048
    $region33: #{tpu_custom_call.1} parent=1 // pred_fallthru
      _
    %v71 = vld [vmem:[#allocation2] sm:$0xff]
    %v72 = vld [vmem:[#allocation2 + $0x8] sm:$0xff]
    %73 = vadd.xlane.f32.xlu0 %v71
    %v74 = vpop.xlane.xlu0 %73
    %75 = vadd.xlane.f32.xlu0 %v72
    %v76 = vpop.xlane.xlu0 %75
    %v77 = vmul.f32 %v74, 0.03125
    %v78 = vmul.f32 %v76, 0.03125
    %v79 = vsub.f32 %v71, %v77
    %v80 = vsub.f32 %v72, %v78
    %v81 = vlaneseq
    %v82 = vand.u32 %v81, 127
    %vm83 = vcmp.lt.s32.totalorder %v82, 32
    %v84 = vsel %vm83, %v79, 0.0
    %v85 = vsel %vm83, %v80, 0.0
    %v86 = vmul.f32 %v84, %v84
    %v87 = vmul.f32 %v85, %v85
    %88 = vadd.xlane.f32.xlu0 %v86
    %v89 = vpop.xlane.xlu0 %88
    %90 = vadd.xlane.f32.xlu0 %v87
    %v91 = vpop.xlane.xlu0 %90
    %v92 = vmul.f32 %v89, 0.03125
    %v93 = vmul.f32 %v91, 0.03125
    %v94 = vadd.f32 %v92, 1e-05
    %v95 = vadd.f32 %v93, 1e-05
    %v96 = vrsqrt.pop %v94
    %v97 = vrsqrt.pop %v95
    %v98 = vld [vmem:[#allocation5] sm:$0x1]
    %v99 = vld [vmem:[#allocation5 + $0x1] sm:$0x1]
    %v100 = vmul.f32 %v84, %v96
    %v101 = vmul.f32 %v85, %v97
    %v102 = vlaneseq
    %v103 = vshrl.u32 %v102, 7
    %v104 = vsub.s32 0, %v103
    %v105 = vrot.slane %v98, %v104
    %v106 = vmul.f32 %v100, %v105
    %v107 = vmul.f32 %v101, %v105
    %v108 = vlaneseq
    %v109 = vshrl.u32 %v108, 7
    %v110 = vsub.s32 0, %v109
    %v111 = vrot.slane %v99, %v110
    %v112 = vadd.f32 %v106, %v111
    %v113 = vadd.f32 %v107, %v111
    %v114 = vld [vmem:[#allocation7] sm:$0xff]
    %v115 = vld [vmem:[#allocation7 + $0x8] sm:$0xff]
    %v116 = vld [vmem:[#allocation7 + $0x10] sm:$0xff]
    %v117 = vld [vmem:[#allocation7 + $0x18] sm:$0xff]
    %v118 = vld [vmem:[#allocation7 + $0x20] sm:$0xff]
    %v119 = vld [vmem:[#allocation7 + $0x28] sm:$0xff]
    %v120 = vld [vmem:[#allocation7 + $0x30] sm:$0xff]
    %v121 = vld [vmem:[#allocation7 + $0x38] sm:$0xff]
    %v122 = vld [vmem:[#allocation7 + $0x40] sm:$0xff]
    %v123 = vld [vmem:[#allocation7 + $0x48] sm:$0xff]
    %v124 = vld [vmem:[#allocation7 + $0x50] sm:$0xff]
    %v125 = vld [vmem:[#allocation7 + $0x58] sm:$0xff]
    %v126 = vld [vmem:[#allocation7 + $0x60] sm:$0xff]
    %v127 = vld [vmem:[#allocation7 + $0x68] sm:$0xff]
    %v128 = vld [vmem:[#allocation7 + $0x70] sm:$0xff]
    %v129 = vld [vmem:[#allocation7 + $0x78] sm:$0xff]
    %130 = vmatprep.subr.mxu0 0.0
    %131 = vmatpush1.msra.mxu0 %v129
    %132 = vmatprep.subr.mxu0 0.0
    %133 = vmatpush1.msra.mxu0 %v128
    %134 = vmatprep.subr.mxu0 0.0
    %135 = vmatpush1.msra.mxu0 %v127
    %136 = vmatprep.subr.mxu0 0.0
    %137 = vmatpush1.msra.mxu0 %v126
    %138 = vmatprep.subr.mxu0 0.0
    %139 = vmatpush1.msra.mxu0 %v125
    %140 = vmatprep.subr.mxu0 0.0
    %141 = vmatpush1.msra.mxu0 %v124
    %142 = vmatprep.subr.mxu0 0.0
    %143 = vmatpush1.msra.mxu0 %v123
    %144 = vmatprep.subr.mxu0 0.0
    %145 = vmatpush1.msra.mxu0 %v122
    %146 = vmatprep.subr.mxu0 0.0
    %147 = vmatpush1.msra.mxu0 %v121
    %148 = vmatprep.subr.mxu0 0.0
    %149 = vmatpush1.msra.mxu0 %v120
    %150 = vmatprep.subr.mxu0 0.0
    %151 = vmatpush1.msra.mxu0 %v119
    %152 = vmatprep.subr.mxu0 0.0
    %153 = vmatpush1.msra.mxu0 %v118
    %154 = vmatprep.subr.mxu0 0.0
    %155 = vmatpush1.msra.mxu0 %v117
    %156 = vmatprep.subr.mxu0 0.0
    %157 = vmatpush1.msra.mxu0 %v116
    %158 = vmatprep.subr.mxu0 0.0
    %159 = vmatpush1.msra.mxu0 %v115
    %160 = vmatprep.subr.mxu0 0.0
    %161 = vmatpush1.msra.mxu0 %v114
    %162 = vmatprep.subr.mxu0 0.0
    %163 = vmatpush2.msra.mxu0 0.0
    %164 = vmatprep.subr.mxu0 0.0
    %165 = vmatpush2.msra.mxu0 0.0
    %166 = vmatprep.subr.mxu0 0.0
    %167 = vmatpush2.msra.mxu0 0.0
    %168 = vmatprep.subr.mxu0 0.0
    %169 = vmatpush2.msra.mxu0 0.0
    %170 = vmatprep.subr.mxu0 0.0
    %171 = vmatpush2.msra.mxu0 0.0
    %172 = vmatprep.subr.mxu0 0.0
    %173 = vmatpush2.msra.mxu0 0.0
    %174 = vmatprep.subr.mxu0 0.0
    %175 = vmatpush2.msra.mxu0 0.0
    %176 = vmatprep.subr.mxu0 0.0
    %177 = vmatpush2.msra.mxu0 0.0
    %178 = vmatprep.subr.mxu0 0.0
    %179 = vmatpush2.msra.mxu0 0.0
    %180 = vmatprep.subr.mxu0 0.0
    %181 = vmatpush2.msra.mxu0 0.0
    %182 = vmatprep.subr.mxu0 0.0
    %183 = vmatpush2.msra.mxu0 0.0
    %184 = vmatprep.subr.mxu0 0.0
    %185 = vmatpush2.msra.mxu0 0.0
    %186 = vmatprep.subr.mxu0 0.0
    %187 = vmatpush2.msra.mxu0 0.0
    %188 = vmatprep.subr.mxu0 0.0
    %189 = vmatpush2.msra.mxu0 0.0
    %190 = vmatprep.subr.mxu0 0.0
    %191 = vmatpush2.msra.mxu0 0.0
    %192 = vmatprep.subr.mxu0 0.0
    %193 = vmatpush2.msra.mxu0 0.0
    %194 = vmatprep.mubr.f32.mxu0 0.0
    %195 = vmatmul.mubr.f32.gmra.mxu0 %v112
    %v196 = vpop.f32.mrf.mxu0
    %v197 = vadd.f32 0.0, %v196
    %v198 = vpop.f32.mrf.mxu0
    %199 = vmatprep.mubr.f32.mxu0 0.0
    %200 = vmatmul.mubr.f32.gmra.mxu0 %v113
    %v201 = vpop.f32.mrf.mxu0
    %v202 = vadd.f32 0.0, %v201
    %v203 = vpop.f32.mrf.mxu0
    %204 = vdwg.mxu0
    %v205 = vmul.f32 %v197, 0.5
    %v206 = vmul.f32 %v202, 0.5
    %v207 = vmul.f32 %v197, 0.70710677
    %v208 = vmul.f32 %v202, 0.70710677
    %v209 = verf.f32.pop %v207
    %v210 = verf.f32.pop %v208
    %v211 = vadd.f32 %v209, 1.0
    %v212 = vadd.f32 %v210, 1.0
    %v213 = vmul.f32 %v205, %v211
    %v214 = vmul.f32 %v206, %v212
    %v215 = vld [vmem:[#allocation8] sm:$0xff]
    %v216 = vld [vmem:[#allocation8 + $0x8] sm:$0xff]
    %v217 = vld [vmem:[#allocation8 + $0x10] sm:$0xff]
    %v218 = vld [vmem:[#allocation8 + $0x18] sm:$0xff]
    %v219 = vld [vmem:[#allocation8 + $0x20] sm:$0xff]
    %v220 = vld [vmem:[#allocation8 + $0x28] sm:$0xff]
    %v221 = vld [vmem:[#allocation8 + $0x30] sm:$0xff]
    %v222 = vld [vmem:[#allocation8 + $0x38] sm:$0xff]
    %v223 = vld [vmem:[#allocation8 + $0x40] sm:$0xff]
    %v224 = vld [vmem:[#allocation8 + $0x48] sm:$0xff]
    %v225 = vld [vmem:[#allocation8 + $0x50] sm:$0xff]
    %v226 = vld [vmem:[#allocation8 + $0x58] sm:$0xff]
    %v227 = vld [vmem:[#allocation8 + $0x60] sm:$0xff]
    %v228 = vld [vmem:[#allocation8 + $0x68] sm:$0xff]
    %v229 = vld [vmem:[#allocation8 + $0x70] sm:$0xff]
    %v230 = vld [vmem:[#allocation8 + $0x78] sm:$0xff]
    %231 = vmatprep.subr.mxu0 0.0
    %232 = vmatpush1.msra.mxu0 %v230
    %233 = vmatprep.subr.mxu0 0.0
    %234 = vmatpush1.msra.mxu0 %v229
    %235 = vmatprep.subr.mxu0 0.0
    %236 = vmatpush1.msra.mxu0 %v228
    %237 = vmatprep.subr.mxu0 0.0
    %238 = vmatpush1.msra.mxu0 %v227
    %239 = vmatprep.subr.mxu0 0.0
    %240 = vmatpush1.msra.mxu0 %v226
    %241 = vmatprep.subr.mxu0 0.0
    %242 = vmatpush1.msra.mxu0 %v225
    %243 = vmatprep.subr.mxu0 0.0
    %244 = vmatpush1.msra.mxu0 %v224
    %245 = vmatprep.subr.mxu0 0.0
    %246 = vmatpush1.msra.mxu0 %v223
    %247 = vmatprep.subr.mxu0 0.0
    %248 = vmatpush1.msra.mxu0 %v222
    %249 = vmatprep.subr.mxu0 0.0
    %250 = vmatpush1.msra.mxu0 %v221
    %251 = vmatprep.subr.mxu0 0.0
    %252 = vmatpush1.msra.mxu0 %v220
    %253 = vmatprep.subr.mxu0 0.0
    %254 = vmatpush1.msra.mxu0 %v219
    %255 = vmatprep.subr.mxu0 0.0
    %256 = vmatpush1.msra.mxu0 %v218
    %257 = vmatprep.subr.mxu0 0.0
    %258 = vmatpush1.msra.mxu0 %v217
    %259 = vmatprep.subr.mxu0 0.0
    %260 = vmatpush1.msra.mxu0 %v216
    %261 = vmatprep.subr.mxu0 0.0
    %262 = vmatpush1.msra.mxu0 %v215
    %263 = vmatprep.subr.mxu0 0.0
    %264 = vmatpush2.msra.mxu0 0.0
    %265 = vmatprep.subr.mxu0 0.0
    %266 = vmatpush2.msra.mxu0 0.0
    %267 = vmatprep.subr.mxu0 0.0
    %268 = vmatpush2.msra.mxu0 0.0
    %269 = vmatprep.subr.mxu0 0.0
    %270 = vmatpush2.msra.mxu0 0.0
    %271 = vmatprep.subr.mxu0 0.0
    %272 = vmatpush2.msra.mxu0 0.0
    %273 = vmatprep.subr.mxu0 0.0
    %274 = vmatpush2.msra.mxu0 0.0
    %275 = vmatprep.subr.mxu0 0.0
    %276 = vmatpush2.msra.mxu0 0.0
    %277 = vmatprep.subr.mxu0 0.0
    %278 = vmatpush2.msra.mxu0 0.0
    %279 = vmatprep.subr.mxu0 0.0
    %280 = vmatpush2.msra.mxu0 0.0
    %281 = vmatprep.subr.mxu0 0.0
    %282 = vmatpush2.msra.mxu0 0.0
    %283 = vmatprep.subr.mxu0 0.0
    %284 = vmatpush2.msra.mxu0 0.0
    %285 = vmatprep.subr.mxu0 0.0
    %286 = vmatpush2.msra.mxu0 0.0
    %287 = vmatprep.subr.mxu0 0.0
    %288 = vmatpush2.msra.mxu0 0.0
    %289 = vmatprep.subr.mxu0 0.0
    %290 = vmatpush2.msra.mxu0 0.0
    %291 = vmatprep.subr.mxu0 0.0
    %292 = vmatpush2.msra.mxu0 0.0
    %293 = vmatprep.subr.mxu0 0.0
    %294 = vmatpush2.msra.mxu0 0.0
    %295 = vmatprep.mubr.f32.mxu0 0.0
    %296 = vmatmul.mubr.f32.gmra.mxu0 %v213
    %v297 = vpop.f32.mrf.mxu0
    %v298 = vadd.f32 0.0, %v297
    %v299 = vpop.f32.mrf.mxu0
    %300 = vmatprep.mubr.f32.mxu0 0.0
    %301 = vmatmul.mubr.f32.gmra.mxu0 %v214
    %v302 = vpop.f32.mrf.mxu0
    %v303 = vadd.f32 0.0, %v302
    %v304 = vpop.f32.mrf.mxu0
    %305 = vdwg.mxu0
    %306 = vst [vmem:[#allocation10] sm:$0xff] %v298
    %307 = vst [vmem:[#allocation10 + $0x8] sm:$0xff] %v303
    // Predicated region
    $region34: #{tpu_custom_call.1} parent=1 // pred_check
      _
    $region35: #{tpu_custom_call.1} parent=1 // pred_check_branch
      %309 = sbr.rel (0) target = $region37
    $region36: #{tpu_custom_call.1} parent=1 // pred_region
      %s311 = ssub.s32 256, 256
      %312 = vsyncadd [#allocation4], %s311
      %s313 = sshll.u32 [#allocation10], 4
      %s314 = int_to_ptr.vmem [resolvable:$true] %s313
      %319 = dma.vmem_to_hbm [thread:$0]  %s314, 256, %s4, [#allocation4], 128, 128, 8
    $region37: #{tpu_custom_call.1} parent=1 // pred_fallthru
      _
    // Predicated region
    $region38: #{tpu_custom_call.1} parent=1 // pred_check
      _
    $region39: #{tpu_custom_call.1} parent=1 // pred_check_branch
      %321 = sbr.rel (0) target = $region41
    $region40: #{tpu_custom_call.1} parent=1 // pred_region
      %322 = dma.done [#allocation4], 256
    $region41: #{tpu_custom_call.1} parent=1 // pred_fallthru
      _
    %323 = vsyncpa [#allocation3], 1
    %324 = vsyncpa [#allocation6], 1
    %325 = vsyncpa [#allocation9], 1
    %326 = vsyncpa [#allocation4], 1

// kernel: tpu_custom_call.1
$region0: #{tpu_custom_call.1}
  #allocation0 [shape = 'u32[]', space=smem, size = 0x4, offset = 0x4, fixed_abs, tag = 'smem constant byte address 0x4 - core index']
  #allocation1 [shape = 'u32[144,128]{1,0:T(1,128)}', space=vmem, size = 0x12000, scoped, tag = 'internal scratch']
  %s0 = inlined_call_operand.hbm [shape: f32[16,128], index: 0, kind: input, shape index: {}]
  %s1 = inlined_call_operand.hbm [shape: f32[2,128], index: 1, kind: input, shape index: {}]
  %s2 = inlined_call_operand.hbm [shape: f32[128,128], index: 2, kind: input, shape index: {}]
  %s3 = inlined_call_operand.hbm [shape: f32[128,128], index: 3, kind: input, shape index: {}]
  %s4 = inlined_call_operand.hbm [shape: f32[16,128], index: 4, kind: output, shape index: {}]
  %s5 = sld [smem:[#allocation0]]
  $region42: #{tpu_custom_call.1} parent=0
    _
  %s7 = ssub.s32 1, %s5
  %s8 = scalar_select 0, %s7, %s5
  $region1: #{tpu_custom_call.1} parent=0
    #allocation2 [shape = 'u8[8192]{0}', space=vmem, size = 0x2000, scoped, tag = 'input window, operand 0, single buffered']
    #allocation3 [shape = 's32[1]{0}', space=sflag, size = 0x4, scoped, tag = 'scoped memory for tpu_custom_call.1']
    #allocation4 [shape = 's32[1]{0}', space=sflag, size = 0x4, scoped, tag = 'scoped memory for tpu_custom_call.1']
    #allocation5 [shape = 'u8[1024]{0}', space=vmem, size = 0x400, scoped, tag = 'input window, operand 1, single buffered']
    #allocation6 [shape = 's32[1]{0}', space=sflag, size = 0x4, scoped, tag = 'scoped memory for tpu_custom_call.1']
    #allocation7 [shape = 'u8[65536]{0}', space=vmem, size = 0x10000, scoped, tag = 'input window, operand 2, single buffered']
    #allocation8 [shape = 'u8[65536]{0}', space=vmem, size = 0x10000, scoped, tag = 'input window, operand 3, single buffered']
    #allocation9 [shape = 's32[1]{0}', space=sflag, size = 0x4, scoped, tag = 'scoped memory for tpu_custom_call.1']
    #allocation10 [shape = 'u8[8192]{0}', space=vmem, size = 0x2000, scoped, tag = 'output window, operand 0, single buffered']
    %9 = vsyncpa [#allocation3], 0
    %10 = vsyncpa [#allocation6], 0
    %11 = vsyncpa [#allocation9], 0
    %12 = vsyncpa [#allocation4], 0
    // Predicated region
    $region2: #{tpu_custom_call.1} parent=1 // pred_check
      _
    $region3: #{tpu_custom_call.1} parent=1 // pred_check_branch
      %14 = sbr.rel (0) target = $region5
    $region4: #{tpu_custom_call.1} parent=1 // pred_region
      %s16 = ssub.s32 256, 256
      %17 = vsyncadd [#allocation3], %s16
      %s18 = sshll.u32 [#allocation2], 4
      %s19 = int_to_ptr.vmem [resolvable:$true] %s18
      %24 = dma.hbm_to_vmem [thread:$0]  %s0, 256, %s19, [#allocation3], 128, 128, 8
    $region5: #{tpu_custom_call.1} parent=1 // pred_fallthru
      _
    // Predicated region
    $region6: #{tpu_custom_call.1} parent=1 // pred_check
      _
    $region7: #{tpu_custom_call.1} parent=1 // pred_check_branch
      %26 = sbr.rel (0) target = $region9
    $region8: #{tpu_custom_call.1} parent=1 // pred_region
      %s28 = ssub.s32 32, 32
      %29 = vsyncadd [#allocation6], %s28
      %s31 = sshll.u32 [#allocation5], 4
      %s32 = int_to_ptr.vmem [resolvable:$true] %s31
      %34 = dma.hbm_to_vmem [thread:$0]  %s1, 32, %s32, [#allocation6]
    $region9: #{tpu_custom_call.1} parent=1 // pred_fallthru
      _
    // Predicated region
    $region10: #{tpu_custom_call.1} parent=1 // pred_check
      _
    $region11: #{tpu_custom_call.1} parent=1 // pred_check_branch
      %36 = sbr.rel (0) target = $region13
    $region12: #{tpu_custom_call.1} parent=1 // pred_region
      %s38 = ssub.s32 2048, 2048
      %39 = vsyncadd [#allocation6], %s38
      %s40 = sshll.u32 [#allocation7], 4
      %s41 = int_to_ptr.vmem [resolvable:$true] %s40
      %46 = dma.hbm_to_vmem [thread:$0]  %s2, 2048, %s41, [#allocation6], 128, 128, 8
    $region13: #{tpu_custom_call.1} parent=1 // pred_fallthru
      _
    // Predicated region
    $region14: #{tpu_custom_call.1} parent=1 // pred_check
      _
    $region15: #{tpu_custom_call.1} parent=1 // pred_check_branch
      %48 = sbr.rel (0) target = $region17
    $region16: #{tpu_custom_call.1} parent=1 // pred_region
      %s50 = ssub.s32 2048, 2048
      %51 = vsyncadd [#allocation9], %s50
      %s52 = sshll.u32 [#allocation8], 4
      %s53 = int_to_ptr.vmem [resolvable:$true] %s52
      %58 = dma.hbm_to_vmem [thread:$0]  %s3, 2048, %s53, [#allocation9], 128, 128, 8
    $region17: #{tpu_custom_call.1} parent=1 // pred_fallthru
      _
    // Predicated region
    $region18: #{tpu_custom_call.1} parent=1 // pred_check
      _
    $region19: #{tpu_custom_call.1} parent=1 // pred_check_branch
      %60 = sbr.rel (0) target = $region21
    $region20: #{tpu_custom_call.1} parent=1 // pred_region
      %61 = dma.done [#allocation3], 256
    $region21: #{tpu_custom_call.1} parent=1 // pred_fallthru
      _
    // Predicated region
    $region22: #{tpu_custom_call.1} parent=1 // pred_check
      _
    $region23: #{tpu_custom_call.1} parent=1 // pred_check_branch
      %63 = sbr.rel (0) target = $region25
    $region24: #{tpu_custom_call.1} parent=1 // pred_region
      %64 = dma.done [#allocation6], 32
    $region25: #{tpu_custom_call.1} parent=1 // pred_fallthru
      _
    // Predicated region
    $region26: #{tpu_custom_call.1} parent=1 // pred_check
      _
    $region27: #{tpu_custom_call.1} parent=1 // pred_check_branch
      %66 = sbr.rel (0) target = $region29
    $region28: #{tpu_custom_call.1} parent=1 // pred_region
      %67 = dma.done [#allocation6], 2048
    $region29: #{tpu_custom_call.1} parent=1 // pred_fallthru
      _
    // Predicated region
    $region30: #{tpu_custom_call.1} parent=1 // pred_check
      _
    $region31: #{tpu_custom_call.1} parent=1 // pred_check_branch
      %69 = sbr.rel (0) target = $region33
    $region32: #{tpu_custom_call.1} parent=1 // pred_region
      %70 = dma.done [#allocation9], 2048
    $region33: #{tpu_custom_call.1} parent=1 // pred_fallthru
      _
    %v71 = vld [vmem:[#allocation2] sm:$0xff]
    %v72 = vld [vmem:[#allocation2 + $0x8] sm:$0xff]
    %73 = vadd.xlane.f32.xlu0 %v71
    %v74 = vpop.xlane.xlu0 %73
    %75 = vadd.xlane.f32.xlu0 %v72
    %v76 = vpop.xlane.xlu0 %75
    %v77 = vmul.f32 %v74, 0.03125
    %v78 = vmul.f32 %v76, 0.03125
    %v79 = vsub.f32 %v71, %v77
    %v80 = vsub.f32 %v72, %v78
    %v81 = vlaneseq
    %v82 = vand.u32 %v81, 127
    %vm83 = vcmp.lt.s32.totalorder %v82, 32
    %v84 = vsel %vm83, %v79, 0.0
    %v85 = vsel %vm83, %v80, 0.0
    %v86 = vmul.f32 %v84, %v84
    %v87 = vmul.f32 %v85, %v85
    %88 = vadd.xlane.f32.xlu0 %v86
    %v89 = vpop.xlane.xlu0 %88
    %90 = vadd.xlane.f32.xlu0 %v87
    %v91 = vpop.xlane.xlu0 %90
    %v92 = vmul.f32 %v89, 0.03125
    %v93 = vmul.f32 %v91, 0.03125
    %v94 = vadd.f32 %v92, 1e-05
    %v95 = vadd.f32 %v93, 1e-05
    %v96 = vrsqrt.pop %v94
    %v97 = vrsqrt.pop %v95
    %v98 = vld [vmem:[#allocation5] sm:$0x1]
    %v99 = vld [vmem:[#allocation5 + $0x1] sm:$0x1]
    %v100 = vmul.f32 %v84, %v96
    %v101 = vmul.f32 %v85, %v97
    %v102 = vlaneseq
    %v103 = vshrl.u32 %v102, 7
    %v104 = vsub.s32 0, %v103
    %v105 = vrot.slane %v98, %v104
    %v106 = vmul.f32 %v100, %v105
    %v107 = vmul.f32 %v101, %v105
    %v108 = vlaneseq
    %v109 = vshrl.u32 %v108, 7
    %v110 = vsub.s32 0, %v109
    %v111 = vrot.slane %v99, %v110
    %v112 = vadd.f32 %v106, %v111
    %v113 = vadd.f32 %v107, %v111
    %v114 = vld [vmem:[#allocation7] sm:$0xff]
    %v115 = vld [vmem:[#allocation7 + $0x8] sm:$0xff]
    %v116 = vld [vmem:[#allocation7 + $0x10] sm:$0xff]
    %v117 = vld [vmem:[#allocation7 + $0x18] sm:$0xff]
    %v118 = vld [vmem:[#allocation7 + $0x20] sm:$0xff]
    %v119 = vld [vmem:[#allocation7 + $0x28] sm:$0xff]
    %v120 = vld [vmem:[#allocation7 + $0x30] sm:$0xff]
    %v121 = vld [vmem:[#allocation7 + $0x38] sm:$0xff]
    %v122 = vld [vmem:[#allocation7 + $0x40] sm:$0xff]
    %v123 = vld [vmem:[#allocation7 + $0x48] sm:$0xff]
    %v124 = vld [vmem:[#allocation7 + $0x50] sm:$0xff]
    %v125 = vld [vmem:[#allocation7 + $0x58] sm:$0xff]
    %v126 = vld [vmem:[#allocation7 + $0x60] sm:$0xff]
    %v127 = vld [vmem:[#allocation7 + $0x68] sm:$0xff]
    %v128 = vld [vmem:[#allocation7 + $0x70] sm:$0xff]
    %v129 = vld [vmem:[#allocation7 + $0x78] sm:$0xff]
    %130 = vmatprep.subr.mxu0 0.0
    %131 = vmatpush1.msra.mxu0 %v129
    %132 = vmatprep.subr.mxu0 0.0
    %133 = vmatpush1.msra.mxu0 %v128
    %134 = vmatprep.subr.mxu0 0.0
    %135 = vmatpush1.msra.mxu0 %v127
    %136 = vmatprep.subr.mxu0 0.0
    %137 = vmatpush1.msra.mxu0 %v126
    %138 = vmatprep.subr.mxu0 0.0
    %139 = vmatpush1.msra.mxu0 %v125
    %140 = vmatprep.subr.mxu0 0.0
    %141 = vmatpush1.msra.mxu0 %v124
    %142 = vmatprep.subr.mxu0 0.0
    %143 = vmatpush1.msra.mxu0 %v123
    %144 = vmatprep.subr.mxu0 0.0
    %145 = vmatpush1.msra.mxu0 %v122
    %146 = vmatprep.subr.mxu0 0.0
    %147 = vmatpush1.msra.mxu0 %v121
    %148 = vmatprep.subr.mxu0 0.0
    %149 = vmatpush1.msra.mxu0 %v120
    %150 = vmatprep.subr.mxu0 0.0
    %151 = vmatpush1.msra.mxu0 %v119
    %152 = vmatprep.subr.mxu0 0.0
    %153 = vmatpush1.msra.mxu0 %v118
    %154 = vmatprep.subr.mxu0 0.0
    %155 = vmatpush1.msra.mxu0 %v117
    %156 = vmatprep.subr.mxu0 0.0
    %157 = vmatpush1.msra.mxu0 %v116
    %158 = vmatprep.subr.mxu0 0.0
    %159 = vmatpush1.msra.mxu0 %v115
    %160 = vmatprep.subr.mxu0 0.0
    %161 = vmatpush1.msra.mxu0 %v114
    %162 = vmatprep.subr.mxu0 0.0
    %163 = vmatpush2.msra.mxu0 0.0
    %164 = vmatprep.subr.mxu0 0.0
    %165 = vmatpush2.msra.mxu0 0.0
    %166 = vmatprep.subr.mxu0 0.0
    %167 = vmatpush2.msra.mxu0 0.0
    %168 = vmatprep.subr.mxu0 0.0
    %169 = vmatpush2.msra.mxu0 0.0
    %170 = vmatprep.subr.mxu0 0.0
    %171 = vmatpush2.msra.mxu0 0.0
    %172 = vmatprep.subr.mxu0 0.0
    %173 = vmatpush2.msra.mxu0 0.0
    %174 = vmatprep.subr.mxu0 0.0
    %175 = vmatpush2.msra.mxu0 0.0
    %176 = vmatprep.subr.mxu0 0.0
    %177 = vmatpush2.msra.mxu0 0.0
    %178 = vmatprep.subr.mxu0 0.0
    %179 = vmatpush2.msra.mxu0 0.0
    %180 = vmatprep.subr.mxu0 0.0
    %181 = vmatpush2.msra.mxu0 0.0
    %182 = vmatprep.subr.mxu0 0.0
    %183 = vmatpush2.msra.mxu0 0.0
    %184 = vmatprep.subr.mxu0 0.0
    %185 = vmatpush2.msra.mxu0 0.0
    %186 = vmatprep.subr.mxu0 0.0
    %187 = vmatpush2.msra.mxu0 0.0
    %188 = vmatprep.subr.mxu0 0.0
    %189 = vmatpush2.msra.mxu0 0.0
    %190 = vmatprep.subr.mxu0 0.0
    %191 = vmatpush2.msra.mxu0 0.0
    %192 = vmatprep.subr.mxu0 0.0
    %193 = vmatpush2.msra.mxu0 0.0
    %194 = vmatprep.mubr.f32.mxu0 0.0
    %195 = vmatmul.mubr.f32.gmra.mxu0 %v112
    %v196 = vpop.f32.mrf.mxu0
    %v197 = vadd.f32 0.0, %v196
    %v198 = vpop.f32.mrf.mxu0
    %199 = vmatprep.mubr.f32.mxu0 0.0
    %200 = vmatmul.mubr.f32.gmra.mxu0 %v113
    %v201 = vpop.f32.mrf.mxu0
    %v202 = vadd.f32 0.0, %v201
    %v203 = vpop.f32.mrf.mxu0
    %204 = vdwg.mxu0
    %v205 = vmul.f32 %v197, 0.5
    %v206 = vmul.f32 %v202, 0.5
    %v207 = vmul.f32 %v197, 0.70710677
    %v208 = vmul.f32 %v202, 0.70710677
    %v209 = verf.f32.pop %v207
    %v210 = verf.f32.pop %v208
    %v211 = vadd.f32 %v209, 1.0
    %v212 = vadd.f32 %v210, 1.0
    %v213 = vmul.f32 %v205, %v211
    %v214 = vmul.f32 %v206, %v212
    %v215 = vld [vmem:[#allocation8] sm:$0xff]
    %v216 = vld [vmem:[#allocation8 + $0x8] sm:$0xff]
    %v217 = vld [vmem:[#allocation8 + $0x10] sm:$0xff]
    %v218 = vld [vmem:[#allocation8 + $0x18] sm:$0xff]
    %v219 = vld [vmem:[#allocation8 + $0x20] sm:$0xff]
    %v220 = vld [vmem:[#allocation8 + $0x28] sm:$0xff]
    %v221 = vld [vmem:[#allocation8 + $0x30] sm:$0xff]
    %v222 = vld [vmem:[#allocation8 + $0x38] sm:$0xff]
    %v223 = vld [vmem:[#allocation8 + $0x40] sm:$0xff]
    %v224 = vld [vmem:[#allocation8 + $0x48] sm:$0xff]
    %v225 = vld [vmem:[#allocation8 + $0x50] sm:$0xff]
    %v226 = vld [vmem:[#allocation8 + $0x58] sm:$0xff]
    %v227 = vld [vmem:[#allocation8 + $0x60] sm:$0xff]
    %v228 = vld [vmem:[#allocation8 + $0x68] sm:$0xff]
    %v229 = vld [vmem:[#allocation8 + $0x70] sm:$0xff]
    %v230 = vld [vmem:[#allocation8 + $0x78] sm:$0xff]
    %231 = vmatprep.subr.mxu0 0.0
    %232 = vmatpush1.msra.mxu0 %v230
    %233 = vmatprep.subr.mxu0 0.0
    %234 = vmatpush1.msra.mxu0 %v229
    %235 = vmatprep.subr.mxu0 0.0
    %236 = vmatpush1.msra.mxu0 %v228
    %237 = vmatprep.subr.mxu0 0.0
    %238 = vmatpush1.msra.mxu0 %v227
    %239 = vmatprep.subr.mxu0 0.0
    %240 = vmatpush1.msra.mxu0 %v226
    %241 = vmatprep.subr.mxu0 0.0
    %242 = vmatpush1.msra.mxu0 %v225
    %243 = vmatprep.subr.mxu0 0.0
    %244 = vmatpush1.msra.mxu0 %v224
    %245 = vmatprep.subr.mxu0 0.0
    %246 = vmatpush1.msra.mxu0 %v223
    %247 = vmatprep.subr.mxu0 0.0
    %248 = vmatpush1.msra.mxu0 %v222
    %249 = vmatprep.subr.mxu0 0.0
    %250 = vmatpush1.msra.mxu0 %v221
    %251 = vmatprep.subr.mxu0 0.0
    %252 = vmatpush1.msra.mxu0 %v220
    %253 = vmatprep.subr.mxu0 0.0
    %254 = vmatpush1.msra.mxu0 %v219
    %255 = vmatprep.subr.mxu0 0.0
    %256 = vmatpush1.msra.mxu0 %v218
    %257 = vmatprep.subr.mxu0 0.0
    %258 = vmatpush1.msra.mxu0 %v217
    %259 = vmatprep.subr.mxu0 0.0
    %260 = vmatpush1.msra.mxu0 %v216
    %261 = vmatprep.subr.mxu0 0.0
    %262 = vmatpush1.msra.mxu0 %v215
    %263 = vmatprep.subr.mxu0 0.0
    %264 = vmatpush2.msra.mxu0 0.0
    %265 = vmatprep.subr.mxu0 0.0
    %266 = vmatpush2.msra.mxu0 0.0
    %267 = vmatprep.subr.mxu0 0.0
    %268 = vmatpush2.msra.mxu0 0.0
    %269 = vmatprep.subr.mxu0 0.0
    %270 = vmatpush2.msra.mxu0 0.0
    %271 = vmatprep.subr.mxu0 0.0
    %272 = vmatpush2.msra.mxu0 0.0
    %273 = vmatprep.subr.mxu0 0.0
    %274 = vmatpush2.msra.mxu0 0.0
    %275 = vmatprep.subr.mxu0 0.0
    %276 = vmatpush2.msra.mxu0 0.0
    %277 = vmatprep.subr.mxu0 0.0
    %278 = vmatpush2.msra.mxu0 0.0
    %279 = vmatprep.subr.mxu0 0.0
    %280 = vmatpush2.msra.mxu0 0.0
    %281 = vmatprep.subr.mxu0 0.0
    %282 = vmatpush2.msra.mxu0 0.0
    %283 = vmatprep.subr.mxu0 0.0
    %284 = vmatpush2.msra.mxu0 0.0
    %285 = vmatprep.subr.mxu0 0.0
    %286 = vmatpush2.msra.mxu0 0.0
    %287 = vmatprep.subr.mxu0 0.0
    %288 = vmatpush2.msra.mxu0 0.0
    %289 = vmatprep.subr.mxu0 0.0
    %290 = vmatpush2.msra.mxu0 0.0
    %291 = vmatprep.subr.mxu0 0.0
    %292 = vmatpush2.msra.mxu0 0.0
    %293 = vmatprep.subr.mxu0 0.0
    %294 = vmatpush2.msra.mxu0 0.0
    %295 = vmatprep.mubr.f32.mxu0 0.0
    %296 = vmatmul.mubr.f32.gmra.mxu0 %v213
    %v297 = vpop.f32.mrf.mxu0
    %v298 = vadd.f32 0.0, %v297
    %v299 = vpop.f32.mrf.mxu0
    %300 = vmatprep.mubr.f32.mxu0 0.0
    %301 = vmatmul.mubr.f32.gmra.mxu0 %v214
    %v302 = vpop.f32.mrf.mxu0
    %v303 = vadd.f32 0.0, %v302
    %v304 = vpop.f32.mrf.mxu0
    %305 = vdwg.mxu0
    %306 = vst [vmem:[#allocation10] sm:$0xff] %v298
    %307 = vst [vmem:[#allocation10 + $0x8] sm:$0xff] %v303
    // Predicated region
    $region34: #{tpu_custom_call.1} parent=1 // pred_check
      _
    $region35: #{tpu_custom_call.1} parent=1 // pred_check_branch
      %309 = sbr.rel (0) target = $region37
    $region36: #{tpu_custom_call.1} parent=1 // pred_region
      %s311 = ssub.s32 256, 256
      %312 = vsyncadd [#allocation4], %s311
      %s313 = sshll.u32 [#allocation10], 4
      %s314 = int_to_ptr.vmem [resolvable:$true] %s313
      %319 = dma.vmem_to_hbm [thread:$0]  %s314, 256, %s4, [#allocation4], 128, 128, 8
    $region37: #{tpu_custom_call.1} parent=1 // pred_fallthru
      _
    // Predicated region
    $region38: #{tpu_custom_call.1} parent=1 // pred_check
      _
    $region39: #{tpu_custom_call.1} parent=1 // pred_check_branch
      %321 = sbr.rel (0) target = $region41
    $region40: #{tpu_custom_call.1} parent=1 // pred_region
      %322 = dma.done [#allocation4], 256
    $region41: #{tpu_custom_call.1} parent=1 // pred_fallthru
      _
    %323 = vsyncpa [#allocation3], 1
    %324 = vsyncpa [#allocation6], 1
    %325 = vsyncpa [#allocation9], 1
    %326 = vsyncpa [#allocation4], 1

</llo_original>
